<compile_context>
chip_gen: v6e
topology: v6e:2x2x1
jax: 0.10.0
libtpu: 0.0.40
codegen_flags: <defaults>
</compile_context>

<pallas_src>
import functools

import jax
import jax.numpy as jnp
from jax.experimental import pallas as pl
from jax.experimental.pallas import tpu as pltpu


def _round_up(x, m):
    return ((x + m - 1) // m) * m


def _pad_dim(d):
    # 128-lane alignment for small dims; 256 alignment once the dim exceeds
    # 128 so K/N feed the full 2x256 MXU on v6e/v7x (v5e's 4x128 MXU is fine
    # with either).
    return _round_up(d, 128) if d <= 128 else _round_up(d, 256)


def _adapt_kernel(tlo_ref, thi_ref, nt_ref, x_ref, w_ref, b_ref, o_ref, *,
                  num_types):
    # tlo/thi: SMEM (n_row_tiles,) int32 scalar-prefetch — min/max node type in
    #          each row tile (nodes are pre-sorted by type, so this is a short
    #          range, usually a single type).
    # nt_ref: (tm, 1) int32          x_ref: (tm, in_pad) bf16
    # w_ref:  (num_types, in_pad, out_pad) bf16  — VMEM-resident (constant map)
    # b_ref:  (num_types, 1, out_pad) f32
    # o_ref:  (tm, out_pad) f32 — written back to HBM once per grid step
    i = pl.program_id(0)
    t_lo = tlo_ref[i]
    t_hi = thi_ref[i]
    nt = nt_ref[...]
    x = x_ref[...]

    o_ref[...] = jnp.zeros_like(o_ref)
    for t in range(num_types):              # static unroll; gated at runtime
        @pl.when(jnp.logical_and(t_lo <= t, t <= t_hi))
        def _compute(t=t):
            h = jnp.dot(x, w_ref[t], preferred_element_type=jnp.float32)
            h = jnp.tanh(h + b_ref[t])                       # f32 epilogue
            o_ref[...] = jnp.where(nt == t, h, o_ref[...])


def prepare_adapt_params(weights, biases):
    """Stack / transpose / lane-pad / bf16-cast per-type nn.Linear params ONCE.

    weights: [num_types, n_hid, in_dim] (torch nn.Linear layout)
    biases:  [num_types, n_hid]
    Returns  w: bf16 [num_types, in_pad, out_pad], b: f32 [num_types, 1, out_pad]
    """
    num_types, n_hid, in_dim = weights.shape
    in_pad = _pad_dim(in_dim)
    out_pad = _pad_dim(n_hid)
    w = jnp.transpose(weights.astype(jnp.float32), (0, 2, 1))    # [T, in, hid]
    w = jnp.pad(w, ((0, 0), (0, in_pad - in_dim), (0, out_pad - n_hid)))
    w = w.astype(jnp.bfloat16)                                   # MXU-native
    b = biases.astype(jnp.float32).reshape(num_types, 1, n_hid)
    b = jnp.pad(b, ((0, 0), (0, 0), (0, out_pad - n_hid)))
    return w, b


@functools.partial(jax.jit, static_argnames=("n_hid", "row_tile"))
def gnn_adapt_forward(node_feature, node_type, w_padded, b_padded, *,
                      n_hid, row_tile=512):
    """node_feature: [N, in_dim] f32; node_type: [N] int;
    (w_padded, b_padded) from prepare_adapt_params."""
    N, in_dim = node_feature.shape
    num_types, in_pad, out_pad = w_padded.shape

    # Row tile: fixed (512) for large N so the grid has many pipelined steps
    # (bump to 1024 on v5e/v6e if desired); for small N split into >=2 tiles so
    # both v7x TensorCores get work.
    tm = int(row_tile)
    if N <= tm:
        tm = max(8, _round_up((N + 1) // 2, 8))
    n_row_tiles = -(-N // tm)
    Np = n_row_tiles * tm

    # Sort nodes by type (group-GEMM style) so each row tile spans 1-2 types;
    # the inverse permutation is applied after the kernel.
    node_type = node_type.astype(jnp.int32)
    order = jnp.argsort(node_type)
    x_sorted = node_feature.astype(jnp.float32)[order]
    nt_sorted = node_type[order]

    x = jnp.pad(x_sorted, ((0, Np - N), (0, in_pad - in_dim)))
    x = x.astype(jnp.bfloat16)                       # bf16 matmul operand
    nt = jnp.pad(nt_sorted, (0, Np - N),
                 constant_values=num_types - 1).reshape(Np, 1)

    # Per-tile type range -> two 1-D SMEM scalar-prefetch arrays (1-D avoids
    # the 2-D SMEM last-dim-pads-to-128 blowup).
    nt_tiles = nt.reshape(n_row_tiles, tm)
    t_lo = jnp.min(nt_tiles, axis=1).astype(jnp.int32)
    t_hi = jnp.max(nt_tiles, axis=1).astype(jnp.int32)

    # Advisory cost: weights fetched once (resident); ~<=2 types computed per
    # sorted row tile.
    cost = pl.CostEstimate(
        flops=2 * Np * in_pad * out_pad * min(2, num_types),
        transcendentals=Np * out_pad * min(2, num_types),
        bytes_accessed=(Np * in_pad * 2                     # x (bf16)
                        + num_types * in_pad * out_pad * 2  # W once (bf16)
                        + Np * out_pad * 4                  # out (f32)
                        + Np * 4),                          # node_type
    )

    # VMEM: double-buffered x / nt / out tiles + resident (conservatively x2)
    # stacked weights + bias.  Cap at 40 MiB to stay safely inside v7x's
    # 64 MiB per-TC VMEM; v5e/v6e (128 MiB) have ample headroom.
    w_bytes = num_types * in_pad * out_pad * 2
    vmem_est = (2 * tm * in_pad * 2 + 2 * tm * 4 + 2 * w_bytes
                + 2 * num_types * out_pad * 4 + 2 * tm * out_pad * 4)
    vmem_limit = min(max(2 * vmem_est, 16 * 1024 * 1024), 40 * 1024 * 1024)

    out = pl.pallas_call(
        functools.partial(_adapt_kernel, num_types=num_types),
        out_shape=jax.ShapeDtypeStruct((Np, out_pad), jnp.float32),
        grid_spec=pltpu.PrefetchScalarGridSpec(
            num_scalar_prefetch=2,
            grid=(n_row_tiles,),
            in_specs=[
                pl.BlockSpec((tm, 1), lambda i, lo, hi: (i, 0)),        # nt
                pl.BlockSpec((tm, in_pad), lambda i, lo, hi: (i, 0)),   # x tile
                pl.BlockSpec((num_types, in_pad, out_pad),
                             lambda i, lo, hi: (0, 0, 0)),              # W (resident)
                pl.BlockSpec((num_types, 1, out_pad),
                             lambda i, lo, hi: (0, 0, 0)),              # b (resident)
            ],
            out_specs=pl.BlockSpec((tm, out_pad), lambda i, lo, hi: (i, 0)),
        ),
        compiler_params=pltpu.CompilerParams(
            dimension_semantics=("parallel",),
            vmem_limit_bytes=vmem_limit),
        cost_estimate=cost,
    )(t_lo, t_hi, nt, x, w_padded, b_padded)

    # Un-sort and strip padding.
    res_sorted = out[:N, :n_hid]
    res = jnp.zeros((N, n_hid), jnp.float32).at[order].set(res_sorted)
    # TODO(synk): Dropout(p=0.2) is identity at inference; training mode would use pltpu.prng_seed/prng_random_bits.
    # TODO(synk): GeneralConv('hgt') message-passing layers are not defined in the provided spec; returning the type-adapted embeddings.
    return res


if __name__ == "__main__":
    key = jax.random.PRNGKey(0)
    N, in_dim, n_hid, num_types = 64, 48, 64, 3

    kx, kt, kw, kb = jax.random.split(key, 4)
    node_feature = jax.random.normal(kx, (N, in_dim), dtype=jnp.float32)
    node_type = jax.random.randint(kt, (N,), 0, num_types, dtype=jnp.int32)
    # deterministic synthetic nn.Linear parameters (torch layout [n_hid, in_dim])
    bound = 1.0 / (in_dim ** 0.5)
    weights = jax.random.uniform(kw, (num_types, n_hid, in_dim),
                                 jnp.float32, -bound, bound)
    biases = jax.random.uniform(kb, (num_types, n_hid),
                                jnp.float32, -bound, bound)

    # one-time parameter prep (transpose + lane padding + bf16), outside jit
    w_pad, b_pad = prepare_adapt_params(weights, biases)

    # row_tile=32 so even this tiny N exercises a multi-step, pipelined row grid
    y = gnn_adapt_forward(node_feature, node_type, w_pad, b_pad,
                          n_hid=n_hid, row_tile=32)
    y = jax.block_until_ready(y)

    # pure-JAX f32 reference of the adapt stage
    res = jnp.zeros((N, n_hid), jnp.float32)
    for t in range(num_types):
        h = jnp.tanh(jnp.dot(node_feature, weights[t].T,
                             precision=jax.lax.Precision.HIGHEST) + biases[t])
        res = jnp.where((node_type == t)[:, None], h, res)

    assert y.shape == res.shape
    # bf16 matmul operands vs f32 HIGHEST reference -> relaxed tolerance
    assert jnp.max(jnp.abs(y - res)) < 3e-2

    print("KERNEL_OK")
</pallas_src>

<mosaic_0001>
module attributes {stable_mosaic.version = 11 : i64} {
  func.func @_adapt_kernel(%arg0: i32, %arg1: memref<2xi32, #tpu.memory_space<smem>>, %arg2: memref<2xi32, #tpu.memory_space<smem>>, %arg3: memref<32x1xi32, #tpu.memory_space<vmem>>, %arg4: memref<32x128xbf16, #tpu.memory_space<vmem>>, %arg5: memref<3x128x128xbf16, #tpu.memory_space<vmem>>, %arg6: memref<3x1x128xf32, #tpu.memory_space<vmem>>, %arg7: memref<32x128xf32, #tpu.memory_space<vmem>>) attributes {dimension_semantics = [#tpu.dimension_semantics<parallel>], iteration_bounds = array<i64: 2>, scalar_prefetch = 2 : i64, scratch_operands = 0 : i64, tpu.core_type = #tpu.core_type<tc>, window_params = [{transform_indices = @transform_0, window_bounds = array<i64: 32, 1>}, {transform_indices = @transform_1, window_bounds = array<i64: 32, 128>}, {pipeline_mode = #tpu.pipeline_mode<synchronous>, transform_indices = @transform_2, window_bounds = array<i64: 3, 128, 128>}, {pipeline_mode = #tpu.pipeline_mode<synchronous>, transform_indices = @transform_3, window_bounds = array<i64: 3, 1, 128>}, {transform_indices = @transform_4, window_bounds = array<i64: 32, 128>}]} {
    %0 = arith.index_cast %arg0 : i32 to index
    %1 = memref.load %arg1[%0] : memref<2xi32, #tpu.memory_space<smem>>
    %2 = arith.index_cast %arg0 : i32 to index
    %3 = memref.load %arg2[%2] : memref<2xi32, #tpu.memory_space<smem>>
    %c0 = arith.constant 0 : index
    %c0_0 = arith.constant 0 : index
    %4 = vector.load %arg3[%c0, %c0_0] : memref<32x1xi32, #tpu.memory_space<vmem>>, vector<32x1xi32>
    %c0_1 = arith.constant 0 : index
    %c0_2 = arith.constant 0 : index
    %5 = vector.load %arg4[%c0_1, %c0_2] : memref<32x128xbf16, #tpu.memory_space<vmem>>, vector<32x128xbf16>
    %cst = arith.constant 0.000000e+00 : f32
    %6 = vector.broadcast %cst : f32 to vector<32x128xf32>
    %c0_3 = arith.constant 0 : index
    %c0_4 = arith.constant 0 : index
    %7 = vector.load %arg7[%c0_3, %c0_4] : memref<32x128xf32, #tpu.memory_space<vmem>>, vector<32x128xf32>
    tpu.vector_store %arg7[%c0_3, %c0_4], %6 {strides = array<i32>} : memref<32x128xf32, #tpu.memory_space<vmem>>, vector<32x128xf32>,
    %c0_i32 = arith.constant 0 : i32
    %8 = arith.cmpi sle, %1, %c0_i32 : i32
    %c0_i32_5 = arith.constant 0 : i32
    %9 = arith.cmpi sge, %3, %c0_i32_5 : i32
    %10 = arith.andi %8, %9 : i1
    %11 = arith.extui %10 : i1 to i32
    %c0_i32_6 = arith.constant 0 : i32
    %12 = arith.cmpi ne, %11, %c0_i32_6 : i32
    scf.if %12 {
      %c0_11 = arith.constant 0 : index
      %c0_12 = arith.constant 0 : index
      %c0_13 = arith.constant 0 : index
      %23 = vector.load %arg5[%c0_11, %c0_12, %c0_13] : memref<3x128x128xbf16, #tpu.memory_space<vmem>>, vector<1x128x128xbf16>
      %24 = vector.shape_cast %23 : vector<1x128x128xbf16> to vector<128x128xbf16>
      %cst_14 = arith.constant dense<0.000000e+00> : vector<32x128xf32>
      %25 = tpu.matmul %5, %24, %cst_14 {dimension_numbers = #tpu.dot_dimension_numbers<[1], [0], [0], [1], [0, 0, 1, 1], [], []>} : vector<32x128xbf16>, vector<128x128xbf16>, vector<32x128xf32> -> vector<32x128xf32>
      %c0_15 = arith.constant 0 : index
      %c0_16 = arith.constant 0 : index
      %c0_17 = arith.constant 0 : index
      %26 = vector.load %arg6[%c0_15, %c0_16, %c0_17] : memref<3x1x128xf32, #tpu.memory_space<vmem>>, vector<1x1x128xf32>
      %27 = vector.shape_cast %26 : vector<1x1x128xf32> to vector<1x128xf32>
      %28 = vector.broadcast %27 : vector<1x128xf32> to vector<32x128xf32>
      %29 = arith.addf %25, %28 : vector<32x128xf32>
      %30 = math.tanh %29 : vector<32x128xf32>
      %c0_i32_18 = arith.constant 0 : i32
      %31 = vector.broadcast %c0_i32_18 : i32 to vector<32x1xi32>
      %32 = arith.cmpi eq, %4, %31 : vector<32x1xi32>
      %c0_19 = arith.constant 0 : index
      %c0_20 = arith.constant 0 : index
      %33 = vector.load %arg7[%c0_19, %c0_20] : memref<32x128xf32, #tpu.memory_space<vmem>>, vector<32x128xf32>
      %34 = vector.shape_cast %32 : vector<32x1xi1> to vector<32x1xi1>
      %35 = vector.broadcast %34 : vector<32x1xi1> to vector<32x128xi1>
      %36 = arith.select %35, %30, %33 : vector<32x128xi1>, vector<32x128xf32>
      %c0_21 = arith.constant 0 : index
      %c0_22 = arith.constant 0 : index
      %37 = vector.load %arg7[%c0_21, %c0_22] : memref<32x128xf32, #tpu.memory_space<vmem>>, vector<32x128xf32>
      tpu.vector_store %arg7[%c0_21, %c0_22], %36 {strides = array<i32>} : memref<32x128xf32, #tpu.memory_space<vmem>>, vector<32x128xf32>,
    } else {
    }
    %c1_i32 = arith.constant 1 : i32
    %13 = arith.cmpi sle, %1, %c1_i32 : i32
    %c1_i32_7 = arith.constant 1 : i32
    %14 = arith.cmpi sge, %3, %c1_i32_7 : i32
    %15 = arith.andi %13, %14 : i1
    %16 = arith.extui %15 : i1 to i32
    %c0_i32_8 = arith.constant 0 : i32
    %17 = arith.cmpi ne, %16, %c0_i32_8 : i32
    scf.if %17 {
      %c1 = arith.constant 1 : index
      %c0_11 = arith.constant 0 : index
      %c0_12 = arith.constant 0 : index
      %23 = vector.load %arg5[%c1, %c0_11, %c0_12] : memref<3x128x128xbf16, #tpu.memory_space<vmem>>, vector<1x128x128xbf16>
      %24 = vector.shape_cast %23 : vector<1x128x128xbf16> to vector<128x128xbf16>
      %cst_13 = arith.constant dense<0.000000e+00> : vector<32x128xf32>
      %25 = tpu.matmul %5, %24, %cst_13 {dimension_numbers = #tpu.dot_dimension_numbers<[1], [0], [0], [1], [0, 0, 1, 1], [], []>} : vector<32x128xbf16>, vector<128x128xbf16>, vector<32x128xf32> -> vector<32x128xf32>
      %c1_14 = arith.constant 1 : index
      %c0_15 = arith.constant 0 : index
      %c0_16 = arith.constant 0 : index
      %26 = vector.load %arg6[%c1_14, %c0_15, %c0_16] : memref<3x1x128xf32, #tpu.memory_space<vmem>>, vector<1x1x128xf32>
      %27 = vector.shape_cast %26 : vector<1x1x128xf32> to vector<1x128xf32>
      %28 = vector.broadcast %27 : vector<1x128xf32> to vector<32x128xf32>
      %29 = arith.addf %25, %28 : vector<32x128xf32>
      %30 = math.tanh %29 : vector<32x128xf32>
      %c1_i32_17 = arith.constant 1 : i32
      %31 = vector.broadcast %c1_i32_17 : i32 to vector<32x1xi32>
      %32 = arith.cmpi eq, %4, %31 : vector<32x1xi32>
      %c0_18 = arith.constant 0 : index
      %c0_19 = arith.constant 0 : index
      %33 = vector.load %arg7[%c0_18, %c0_19] : memref<32x128xf32, #tpu.memory_space<vmem>>, vector<32x128xf32>
      %34 = vector.shape_cast %32 : vector<32x1xi1> to vector<32x1xi1>
      %35 = vector.broadcast %34 : vector<32x1xi1> to vector<32x128xi1>
      %36 = arith.select %35, %30, %33 : vector<32x128xi1>, vector<32x128xf32>
      %c0_20 = arith.constant 0 : index
      %c0_21 = arith.constant 0 : index
      %37 = vector.load %arg7[%c0_20, %c0_21] : memref<32x128xf32, #tpu.memory_space<vmem>>, vector<32x128xf32>
      tpu.vector_store %arg7[%c0_20, %c0_21], %36 {strides = array<i32>} : memref<32x128xf32, #tpu.memory_space<vmem>>, vector<32x128xf32>,
    } else {
    }
    %c2_i32 = arith.constant 2 : i32
    %18 = arith.cmpi sle, %1, %c2_i32 : i32
    %c2_i32_9 = arith.constant 2 : i32
    %19 = arith.cmpi sge, %3, %c2_i32_9 : i32
    %20 = arith.andi %18, %19 : i1
    %21 = arith.extui %20 : i1 to i32
    %c0_i32_10 = arith.constant 0 : i32
    %22 = arith.cmpi ne, %21, %c0_i32_10 : i32
    scf.if %22 {
      %c2 = arith.constant 2 : index
      %c0_11 = arith.constant 0 : index
      %c0_12 = arith.constant 0 : index
      %23 = vector.load %arg5[%c2, %c0_11, %c0_12] : memref<3x128x128xbf16, #tpu.memory_space<vmem>>, vector<1x128x128xbf16>
      %24 = vector.shape_cast %23 : vector<1x128x128xbf16> to vector<128x128xbf16>
      %cst_13 = arith.constant dense<0.000000e+00> : vector<32x128xf32>
      %25 = tpu.matmul %5, %24, %cst_13 {dimension_numbers = #tpu.dot_dimension_numbers<[1], [0], [0], [1], [0, 0, 1, 1], [], []>} : vector<32x128xbf16>, vector<128x128xbf16>, vector<32x128xf32> -> vector<32x128xf32>
      %c2_14 = arith.constant 2 : index
      %c0_15 = arith.constant 0 : index
      %c0_16 = arith.constant 0 : index
      %26 = vector.load %arg6[%c2_14, %c0_15, %c0_16] : memref<3x1x128xf32, #tpu.memory_space<vmem>>, vector<1x1x128xf32>
      %27 = vector.shape_cast %26 : vector<1x1x128xf32> to vector<1x128xf32>
      %28 = vector.broadcast %27 : vector<1x128xf32> to vector<32x128xf32>
      %29 = arith.addf %25, %28 : vector<32x128xf32>
      %30 = math.tanh %29 : vector<32x128xf32>
      %c2_i32_17 = arith.constant 2 : i32
      %31 = vector.broadcast %c2_i32_17 : i32 to vector<32x1xi32>
      %32 = arith.cmpi eq, %4, %31 : vector<32x1xi32>
      %c0_18 = arith.constant 0 : index
      %c0_19 = arith.constant 0 : index
      %33 = vector.load %arg7[%c0_18, %c0_19] : memref<32x128xf32, #tpu.memory_space<vmem>>, vector<32x128xf32>
      %34 = vector.shape_cast %32 : vector<32x1xi1> to vector<32x1xi1>
      %35 = vector.broadcast %34 : vector<32x1xi1> to vector<32x128xi1>
      %36 = arith.select %35, %30, %33 : vector<32x128xi1>, vector<32x128xf32>
      %c0_20 = arith.constant 0 : index
      %c0_21 = arith.constant 0 : index
      %37 = vector.load %arg7[%c0_20, %c0_21] : memref<32x128xf32, #tpu.memory_space<vmem>>, vector<32x128xf32>
      tpu.vector_store %arg7[%c0_20, %c0_21], %36 {strides = array<i32>} : memref<32x128xf32, #tpu.memory_space<vmem>>, vector<32x128xf32>,
    } else {
    }
    return
  }
  func.func @transform_0(%arg0: i32, %arg1: memref<2xi32, #tpu.memory_space<smem>>, %arg2: memref<2xi32, #tpu.memory_space<smem>>) -> (i32, i32) {
    %c0_i32 = arith.constant 0 : i32
    %c0_i32_0 = arith.constant 0 : i32
    return %arg0, %c0_i32 : i32, i32
  }
  func.func @transform_1(%arg0: i32, %arg1: memref<2xi32, #tpu.memory_space<smem>>, %arg2: memref<2xi32, #tpu.memory_space<smem>>) -> (i32, i32) {
    %c0_i32 = arith.constant 0 : i32
    %c0_i32_0 = arith.constant 0 : i32
    return %arg0, %c0_i32 : i32, i32
  }
  func.func @transform_2(%arg0: i32, %arg1: memref<2xi32, #tpu.memory_space<smem>>, %arg2: memref<2xi32, #tpu.memory_space<smem>>) -> (i32, i32, i32) {
    %c0_i32 = arith.constant 0 : i32
    %c0_i32_0 = arith.constant 0 : i32
    %c0_i32_1 = arith.constant 0 : i32
    %c0_i32_2 = arith.constant 0 : i32
    return %c0_i32, %c0_i32_0, %c0_i32_1 : i32, i32, i32
  }
  func.func @transform_3(%arg0: i32, %arg1: memref<2xi32, #tpu.memory_space<smem>>, %arg2: memref<2xi32, #tpu.memory_space<smem>>) -> (i32, i32, i32) {
    %c0_i32 = arith.constant 0 : i32
    %c0_i32_0 = arith.constant 0 : i32
    %c0_i32_1 = arith.constant 0 : i32
    %c0_i32_2 = arith.constant 0 : i32
    return %c0_i32, %c0_i32_0, %c0_i32_1 : i32, i32, i32
  }
  func.func @transform_4(%arg0: i32, %arg1: memref<2xi32, #tpu.memory_space<smem>>, %arg2: memref<2xi32, #tpu.memory_space<smem>>) -> (i32, i32) {
    %c0_i32 = arith.constant 0 : i32
    %c0_i32_0 = arith.constant 0 : i32
    return %arg0, %c0_i32 : i32, i32
  }
}

</mosaic_0001>

<llo_original>
// kernel: gnn_adapt_forward.1
$region0: #{gnn_adapt_forward.1}
  #allocation0 [shape = 'u32[]', space=smem, size = 0x4, offset = 0x4, fixed_abs, tag = 'smem constant byte address 0x4 - core index']
  #allocation1 [shape = 'u32[144,128]{1,0:T(1,128)}', space=vmem, size = 0x12000, scoped, tag = 'internal scratch']
  #allocation2 [shape = 's32[1]{0}', space=sflag, size = 0x4, scoped, tag = 'scoped memory for gnn_adapt_forward.1']
  #allocation3 [shape = 'u8[512]{0}', space=smem, size = 0x200, scoped, tag = 'prefetched SMEM operand 0']
  #allocation4 [shape = 'u8[512]{0}', space=smem, size = 0x200, scoped, tag = 'prefetched SMEM operand 1']
  %s0 = inlined_call_operand.vmem [shape: s32[2], index: 0, kind: input, shape index: {}]
  %s1 = inlined_call_operand.vmem [shape: s32[2], index: 1, kind: input, shape index: {}]
  %s2 = inlined_call_operand.vmem [shape: s32[64,1], index: 2, kind: input, shape index: {}]
  %s3 = inlined_call_operand.vmem [shape: bf16[64,128], index: 3, kind: input, shape index: {}]
  %s4 = inlined_call_operand.vmem [shape: bf16[3,128,128], index: 4, kind: input, shape index: {}]
  %s5 = inlined_call_operand.vmem [shape: f32[3,1,128], index: 5, kind: input, shape index: {}]
  %s6 = inlined_call_operand.vmem [shape: f32[64,128], index: 6, kind: output, shape index: {}]
  %s7 = sld [smem:[#allocation0]]
  $region61: #{gnn_adapt_forward.1} parent=0
    _
  %s9 = ssub.s32 1, %s7
  %s10 = scalar_select 0, %s9, %s7
  %s11 = sshll.u32 %s0, 4
  %s12 = int_to_ptr.vmem [resolvable:$true] %s11
  %14 = dma.vmem_to_smem %s12, 16, [#allocation3], [#allocation2]
  %s15 = sshll.u32 %s1, 4
  %s16 = int_to_ptr.vmem [resolvable:$true] %s15
  %18 = dma.vmem_to_smem %s16, 16, [#allocation4], [#allocation2]
  %19 = dma.done [#allocation2], 32
  %20 = sfence
  loop: start=0, step=1, limit=4
  $region2: #{gnn_adapt_forward.1} parent=0 // loop_pre_header
    _
  $region3: #{gnn_adapt_forward.1} parent=0 // loop_header
    %s22 = sphi 0, %s26
    %p23 = scmp.ge.s32.totalorder %s22, 4
    %s32 = sphi 0, %s34
    %s35 = sphi 0, %s32
    %s36 = sphi 0, %s35
    %s52 = sphi 0, %s36
    %s58 = sphi 0, %s60
    %s61 = sphi 0, %s58
    %s62 = sphi 0, %s61
    %s78 = sphi 0, %s62
    %s82 = sphi 0, %s82
    %s84 = sphi 0, %s82
    %s85 = sphi 0, %s84
    %s99 = sphi 0, %s85
    %s103 = sphi 0, %s103
    %s105 = sphi 0, %s103
    %s106 = sphi 0, %s105
    %s120 = sphi 0, %s106
    %s126 = sphi 0, %s128
    %s129 = sphi 0, %s126
    %s130 = sphi 0, %s129
    %s146 = sphi 0, %s130
  $region4: #{gnn_adapt_forward.1} parent=0 // loop_header_branch
    %25 = sbr.rel (%p23) target = $region8
  $region5: #{gnn_adapt_forward.1} parent=0 // loop_body
    %s27 = ssub.s32 %s22, 1
    %s28 = ssub.s32 %s22, 2
    %s29 = sadd.s32 %s22, 1
    %s30 = ssub.s32 %s22, %s29
    %p31 = scmp.eq.s32.totalorder %s30, 0
    %s33 = sadd.s32 %s32, 1
    %s34 = scalar_select %p31, %s32, %s33
    %p37 = pneg %p31
    %p38 = scmp.eq.s32.totalorder %s22, 1
    %p39 = por %p37, %p38
    %p40 = scmp.ne.s32.totalorder %s32, %s35
    %p41 = scmp.eq.s32.totalorder %s22, 0
    %p42 = por %p40, %p41
    %p43 = scmp.ne.s32.totalorder %s32, %s35
    %p44 = scmp.eq.s32.totalorder %s27, 1
    %p45 = por %p43, %p44
    %p46 = scmp.ne.s32.totalorder %s35, %s36
    %p47 = scmp.eq.s32.totalorder %s27, 0
    %p48 = por %p46, %p47
    %p49 = scmp.ne.s32.totalorder %s35, %s36
    %p50 = scmp.eq.s32.totalorder %s28, 1
    %p51 = por %p49, %p50
    %p53 = scmp.ne.s32.totalorder %s36, %s52
    %p54 = scmp.eq.s32.totalorder %s28, 0
    %p55 = por %p53, %p54
    %s56 = ssub.s32 %s22, %s29
    %p57 = scmp.eq.s32.totalorder %s56, 0
    %s59 = sadd.s32 %s58, 1
    %s60 = scalar_select %p57, %s58, %s59
    %p63 = pneg %p57
    %p64 = scmp.eq.s32.totalorder %s22, 1
    %p65 = por %p63, %p64
    %p66 = scmp.ne.s32.totalorder %s58, %s61
    %p67 = scmp.eq.s32.totalorder %s22, 0
    %p68 = por %p66, %p67
    %p69 = scmp.ne.s32.totalorder %s58, %s61
    %p70 = scmp.eq.s32.totalorder %s27, 1
    %p71 = por %p69, %p70
    %p72 = scmp.ne.s32.totalorder %s61, %s62
    %p73 = scmp.eq.s32.totalorder %s27, 0
    %p74 = por %p72, %p73
    %p75 = scmp.ne.s32.totalorder %s61, %s62
    %p76 = scmp.eq.s32.totalorder %s28, 1
    %p77 = por %p75, %p76
    %p79 = scmp.ne.s32.totalorder %s62, %s78
    %p80 = scmp.eq.s32.totalorder %s28, 0
    %p81 = por %p79, %p80
    %s83 = sadd.s32 %s82, 1
    %p86 = scmp.eq.s32.totalorder %s22, 1
    %p87 = scmp.ne.s32.totalorder %s82, %s84
    %p88 = scmp.eq.s32.totalorder %s22, 0
    %p89 = por %p87, %p88
    %p90 = scmp.ne.s32.totalorder %s82, %s84
    %p91 = scmp.eq.s32.totalorder %s27, 1
    %p92 = por %p90, %p91
    %p93 = scmp.ne.s32.totalorder %s84, %s85
    %p94 = scmp.eq.s32.totalorder %s27, 0
    %p95 = por %p93, %p94
    %p96 = scmp.ne.s32.totalorder %s84, %s85
    %p97 = scmp.eq.s32.totalorder %s28, 1
    %p98 = por %p96, %p97
    %p100 = scmp.ne.s32.totalorder %s85, %s99
    %p101 = scmp.eq.s32.totalorder %s28, 0
    %p102 = por %p100, %p101
    %s104 = sadd.s32 %s103, 1
    %p107 = scmp.eq.s32.totalorder %s22, 1
    %p108 = scmp.ne.s32.totalorder %s103, %s105
    %p109 = scmp.eq.s32.totalorder %s22, 0
    %p110 = por %p108, %p109
    %p111 = scmp.ne.s32.totalorder %s103, %s105
    %p112 = scmp.eq.s32.totalorder %s27, 1
    %p113 = por %p111, %p112
    %p114 = scmp.ne.s32.totalorder %s105, %s106
    %p115 = scmp.eq.s32.totalorder %s27, 0
    %p116 = por %p114, %p115
    %p117 = scmp.ne.s32.totalorder %s105, %s106
    %p118 = scmp.eq.s32.totalorder %s28, 1
    %p119 = por %p117, %p118
    %p121 = scmp.ne.s32.totalorder %s106, %s120
    %p122 = scmp.eq.s32.totalorder %s28, 0
    %p123 = por %p121, %p122
    %s124 = ssub.s32 %s22, %s29
    %p125 = scmp.eq.s32.totalorder %s124, 0
    %s127 = sadd.s32 %s126, 1
    %s128 = scalar_select %p125, %s126, %s127
    %p131 = pneg %p125
    %p132 = scmp.eq.s32.totalorder %s22, 1
    %p133 = por %p131, %p132
    %p134 = scmp.ne.s32.totalorder %s126, %s129
    %p135 = scmp.eq.s32.totalorder %s22, 0
    %p136 = por %p134, %p135
    %p137 = scmp.ne.s32.totalorder %s126, %s129
    %p138 = scmp.eq.s32.totalorder %s27, 1
    %p139 = por %p137, %p138
    %p140 = scmp.ne.s32.totalorder %s129, %s130
    %p141 = scmp.eq.s32.totalorder %s27, 0
    %p142 = por %p140, %p141
    %p143 = scmp.ne.s32.totalorder %s129, %s130
    %p144 = scmp.eq.s32.totalorder %s28, 1
    %p145 = por %p143, %p144
    %p147 = scmp.ne.s32.totalorder %s130, %s146
    %p148 = scmp.eq.s32.totalorder %s28, 0
    %p149 = por %p147, %p148
    %p150 = scmp.le.s32.totalorder 1, %s22
    %p151 = scmp.lt.s32.totalorder %s22, 3
    %p152 = pnand %p150, %p151
    %p153 = pneg %p152
    // Predicated region
    $region9: #{gnn_adapt_forward.1} parent=5 // pred_check
      _
    $region10: #{gnn_adapt_forward.1} parent=5 // pred_check_branch
      %155 = sbr.rel (%p152) target = $region12
    $region11: #{gnn_adapt_forward.1} parent=5 // pred_region
      %s156 = ssub.s32 %s22, 1
      // Predicated region
      $region13: #{gnn_adapt_forward.1} parent=11 // pred_check
        %p157 = pneg %p95
      $region14: #{gnn_adapt_forward.1} parent=11 // pred_check_branch
        %159 = sbr.rel (%p157) target = $region16
      $region15: #{gnn_adapt_forward.1} parent=11 // pred_region
        _
      $region16: #{gnn_adapt_forward.1} parent=11 // pred_fallthru
        _
      // Predicated region
      $region17: #{gnn_adapt_forward.1} parent=11 // pred_check
        %p160 = pneg %p116
      $region18: #{gnn_adapt_forward.1} parent=11 // pred_check_branch
        %162 = sbr.rel (%p160) target = $region20
      $region19: #{gnn_adapt_forward.1} parent=11 // pred_region
        _
      $region20: #{gnn_adapt_forward.1} parent=11 // pred_fallthru
        _
    $region12: #{gnn_adapt_forward.1} parent=5 // pred_fallthru
      _
    %p163 = scmp.lt.s32.totalorder %s22, 2
    // Predicated region
    $region21: #{gnn_adapt_forward.1} parent=5 // pred_check
      %p164 = pneg %p163
    $region22: #{gnn_adapt_forward.1} parent=5 // pred_check_branch
      %166 = sbr.rel (%p164) target = $region24
    $region23: #{gnn_adapt_forward.1} parent=5 // pred_region
      // Predicated region
      $region25: #{gnn_adapt_forward.1} parent=23 // pred_check
        %p167 = pneg %p42
      $region26: #{gnn_adapt_forward.1} parent=23 // pred_check_branch
        %169 = sbr.rel (%p167) target = $region28
      $region27: #{gnn_adapt_forward.1} parent=23 // pred_region
        %s170 = smul.u32 4, %s22
        %p171 = scmp.lt.s32.totalorder %s170, 7
        %s172 = scalar_select %p171, %s170, 7
        %s173 = smul.addr %s172, 8
        %s174 = scalar_lea.vmem %s2, %s173
        %s175 = smul.u32 4, %s22
      $region28: #{gnn_adapt_forward.1} parent=23 // pred_fallthru
        _
      // Predicated region
      $region29: #{gnn_adapt_forward.1} parent=23 // pred_check
        %p176 = pneg %p68
      $region30: #{gnn_adapt_forward.1} parent=23 // pred_check_branch
        %178 = sbr.rel (%p176) target = $region32
      $region31: #{gnn_adapt_forward.1} parent=23 // pred_region
        %s179 = smul.u32 4, %s22
        %p180 = scmp.lt.s32.totalorder %s179, 7
        %s181 = scalar_select %p180, %s179, 7
        %s182 = smul.addr %s181, 4
        %s183 = scalar_lea.vmem %s3, %s182
        %s184 = smul.u32 4, %s22
      $region32: #{gnn_adapt_forward.1} parent=23 // pred_fallthru
        _
    $region24: #{gnn_adapt_forward.1} parent=5 // pred_fallthru
      _
    %p185 = scmp.le.s32.totalorder 1, %s22
    %p186 = scmp.lt.s32.totalorder %s22, 3
    %p187 = pnand %p185, %p186
    %p188 = pneg %p187
    // Predicated region
    $region33: #{gnn_adapt_forward.1} parent=5 // pred_check
      _
    $region34: #{gnn_adapt_forward.1} parent=5 // pred_check_branch
      %190 = sbr.rel (%p187) target = $region36
    $region35: #{gnn_adapt_forward.1} parent=5 // pred_region
      %s191 = ssub.s32 %s22, 1
      %s192 = smul.u32 4, %s27
      %p193 = scmp.lt.s32.totalorder %s192, 7
      %s194 = scalar_select %p193, %s192, 7
      %s195 = smul.addr %s194, 8
      %s196 = scalar_lea.vmem %s2, %s195
      %p197 = pneg %p48
      %p198 = pneg %p45
      %s199 = smul.u32 4, %s27
      %p200 = scmp.lt.s32.totalorder %s199, 7
      %s201 = scalar_select %p200, %s199, 7
      %s202 = smul.addr %s201, 4
      %s203 = scalar_lea.vmem %s3, %s202
      %p204 = pneg %p74
      %p205 = pneg %p71
      %p206 = pneg %p95
      %p207 = pneg %p92
      %p208 = pneg %p116
      %p209 = pneg %p113
      %p210 = pneg %p142
      %p211 = pneg %p139
      %s212 = smul.u32 4, %s27
      %p213 = scmp.lt.s32.totalorder %s212, 7
      %s214 = scalar_select %p213, %s212, 7
      %s215 = smul.addr %s214, 8
      %s216 = scalar_lea.vmem %s6, %s215
      %s217 = smul.u32 4, %s27
      %p218 = scmp.lt.s32.totalorder %s217, 7
      %s219 = scalar_select %p218, %s217, 7
      %s220 = smul.addr %s219, 8
      %s221 = scalar_lea.vmem %s2, %s220
      %s222 = smul.u32 4, %s27
      %s223 = smul.u32 4, %s27
      %p224 = scmp.lt.s32.totalorder %s223, 7
      %s225 = scalar_select %p224, %s223, 7
      %s226 = smul.addr %s225, 4
      %s227 = scalar_lea.vmem %s3, %s226
      %s228 = smul.u32 4, %s27
      %s229 = smul.u32 4, %s27
      %p230 = scmp.lt.s32.totalorder %s229, 7
      %s231 = scalar_select %p230, %s229, 7
      %s232 = smul.addr %s231, 8
      %s233 = scalar_lea.vmem %s6, %s232
      %s234 = smul.u32 4, %s27
      %s236 = sld [smem:[#allocation3 + %s27]]
      %s237 = sld [smem:[#allocation4 + %s27]]
      %v238 = vld [vmem:[%s221] sm:$0xff]
      %v239 = vld [vmem:[%s221 + $0x8] sm:$0xff]
      %v240 = vld [vmem:[%s221 + $0x10] sm:$0xff]
      %v241 = vld [vmem:[%s221 + $0x18] sm:$0xff]
      %v242 = vld [vmem:[%s227] sm:$0xf]
      %v243 = vld [vmem:[%s227 + $0x4] sm:$0xf]
      %v244 = vld [vmem:[%s227 + $0x8] sm:$0xf]
      %v245 = vld [vmem:[%s227 + $0xc] sm:$0xf]
      %246 = vst [vmem:[%s233] sm:$0xff] 0.0
      %247 = vst [vmem:[%s233 + $0x8] sm:$0xff] 0.0
      %248 = vst [vmem:[%s233 + $0x10] sm:$0xff] 0.0
      %249 = vst [vmem:[%s233 + $0x18] sm:$0xff] 0.0
      %p250 = scmp.le.s32.totalorder %s236, 0
      %p251 = scmp.ge.s32.totalorder %s237, 0
      %p252 = pnand %p250, %p251
      %p253 = pneg %p252
      // Predicated region
      $region37: #{gnn_adapt_forward.1} parent=35 // pred_check
        _
      $region38: #{gnn_adapt_forward.1} parent=35 // pred_check_branch
        %255 = sbr.rel (%p252) target = $region40
      $region39: #{gnn_adapt_forward.1} parent=35 // pred_region
        %v256 = vld [vmem:[%s4] sm:$0xf]
        %v257 = vld [vmem:[%s4 + $0x4] sm:$0xf]
        %v258 = vld [vmem:[%s4 + $0x8] sm:$0xf]
        %v259 = vld [vmem:[%s4 + $0xc] sm:$0xf]
        %v260 = vld [vmem:[%s4 + $0x10] sm:$0xf]
        %v261 = vld [vmem:[%s4 + $0x14] sm:$0xf]
        %v262 = vld [vmem:[%s4 + $0x18] sm:$0xf]
        %v263 = vld [vmem:[%s4 + $0x1c] sm:$0xf]
        %v264 = vld [vmem:[%s4 + $0x20] sm:$0xf]
        %v265 = vld [vmem:[%s4 + $0x24] sm:$0xf]
        %v266 = vld [vmem:[%s4 + $0x28] sm:$0xf]
        %v267 = vld [vmem:[%s4 + $0x2c] sm:$0xf]
        %v268 = vld [vmem:[%s4 + $0x30] sm:$0xf]
        %v269 = vld [vmem:[%s4 + $0x34] sm:$0xf]
        %v270 = vld [vmem:[%s4 + $0x38] sm:$0xf]
        %v271 = vld [vmem:[%s4 + $0x3c] sm:$0xf]
        %v272 = vld [vmem:[%s5] sm:$0x1]
        %v274 = vlaneseq
        %v275 = vshrl.u32 %v274, 7
        %v276 = vsub.s32 0, %v275
        %v277 = vrot.slane %v272, %v276
        %v283 = vunpack.c.l.b16 %v242
        %v284 = vunpack.c.l.b16 %v243
        %v285 = vunpack.c.l.b16 %v244
        %v286 = vunpack.c.l.b16 %v245
        %v287 = vpack.c.b16 %v284, %v283
        %v288 = vpack.c.b16 %v286, %v285
        %v307 = vunpack.c.l.b16 %v256
        %v308 = vunpack.c.l.b16 %v257
        %v309 = vunpack.c.l.b16 %v258
        %v310 = vunpack.c.l.b16 %v259
        %v311 = vunpack.c.l.b16 %v260
        %v312 = vunpack.c.l.b16 %v261
        %v313 = vunpack.c.l.b16 %v262
        %v314 = vunpack.c.l.b16 %v263
        %v315 = vunpack.c.l.b16 %v264
        %v316 = vunpack.c.l.b16 %v265
        %v317 = vunpack.c.l.b16 %v266
        %v318 = vunpack.c.l.b16 %v267
        %v319 = vunpack.c.l.b16 %v268
        %v320 = vunpack.c.l.b16 %v269
        %v321 = vunpack.c.l.b16 %v270
        %v322 = vunpack.c.l.b16 %v271
        %v323 = vpack.c.b16 %v308, %v307
        %v324 = vpack.c.b16 %v310, %v309
        %v325 = vpack.c.b16 %v312, %v311
        %v326 = vpack.c.b16 %v314, %v313
        %v327 = vpack.c.b16 %v316, %v315
        %v328 = vpack.c.b16 %v318, %v317
        %v329 = vpack.c.b16 %v320, %v319
        %v330 = vpack.c.b16 %v322, %v321
        %339 = vmatprep.subr.bf16.mxu0 0
        %340 = vmatpush1.bf16.msra.mxu0 %v330
        %341 = vmatprep.subr.bf16.mxu0 0
        %342 = vmatpush1.bf16.msra.mxu0 %v329
        %343 = vmatprep.subr.bf16.mxu0 0
        %344 = vmatpush1.bf16.msra.mxu0 %v328
        %345 = vmatprep.subr.bf16.mxu0 0
        %346 = vmatpush1.bf16.msra.mxu0 %v327
        %347 = vmatprep.subr.bf16.mxu0 0
        %348 = vmatpush1.bf16.msra.mxu0 %v326
        %349 = vmatprep.subr.bf16.mxu0 0
        %350 = vmatpush1.bf16.msra.mxu0 %v325
        %351 = vmatprep.subr.bf16.mxu0 0
        %352 = vmatpush1.bf16.msra.mxu0 %v324
        %353 = vmatprep.subr.bf16.mxu0 0
        %354 = vmatpush1.bf16.msra.mxu0 %v323
        %355 = vmatprep.subr.bf16.mxu0 0
        %356 = vmatpush2.bf16.msra.mxu0 0
        %357 = vmatprep.subr.bf16.mxu0 0
        %358 = vmatpush2.bf16.msra.mxu0 0
        %359 = vmatprep.subr.bf16.mxu0 0
        %360 = vmatpush2.bf16.msra.mxu0 0
        %361 = vmatprep.subr.bf16.mxu0 0
        %362 = vmatpush2.bf16.msra.mxu0 0
        %363 = vmatprep.subr.bf16.mxu0 0
        %364 = vmatpush2.bf16.msra.mxu0 0
        %365 = vmatprep.subr.bf16.mxu0 0
        %366 = vmatpush2.bf16.msra.mxu0 0
        %367 = vmatprep.subr.bf16.mxu0 0
        %368 = vmatpush2.bf16.msra.mxu0 0
        %369 = vmatprep.subr.bf16.mxu0 0
        %370 = vmatpush2.bf16.msra.mxu0 0
        %371 = vmatprep.mubr.bf16.mxu0 0
        %372 = vmatmul.mubr.bf16.gmra.mxu0 %v287
        %v373 = vpop.f32.mrf.mxu0
        %v374 = vadd.f32 %v277, %v373
        %v375 = vpop.f32.mrf.mxu0
        %v376 = vpop.f32.mrf.mxu0
        %v377 = vadd.f32 %v277, %v376
        %v378 = vpop.f32.mrf.mxu0
        %379 = vmatprep.mubr.bf16.mxu0 0
        %380 = vmatmul.mubr.bf16.gmra.mxu0 %v288
        %v381 = vpop.f32.mrf.mxu0
        %v382 = vadd.f32 %v277, %v381
        %v383 = vpop.f32.mrf.mxu0
        %v384 = vpop.f32.mrf.mxu0
        %v385 = vadd.f32 %v277, %v384
        %v386 = vpop.f32.mrf.mxu0
        %387 = vdwg.mxu0
        %v388 = vtanh.pop %v374
        %v389 = vtanh.pop %v377
        %v390 = vtanh.pop %v382
        %v391 = vtanh.pop %v385
        %vm392 = vcmp.eq.s32.totalorder %v238, 0
        %vm393 = vcmp.eq.s32.totalorder %v239, 0
        %vm394 = vcmp.eq.s32.totalorder %v240, 0
        %vm395 = vcmp.eq.s32.totalorder %v241, 0
        %v396 = vld [vmem:[%s233] sm:$0xff]
        %v397 = vld [vmem:[%s233 + $0x8] sm:$0xff]
        %v398 = vld [vmem:[%s233 + $0x10] sm:$0xff]
        %v399 = vld [vmem:[%s233 + $0x18] sm:$0xff]
        %v400 = vsel %vm392, 1, 0
        %v401 = vsel %vm393, 1, 0
        %v402 = vsel %vm394, 1, 0
        %v403 = vsel %vm395, 1, 0
        %404 = vset.pattern.permute.xlu0 0
        %405 = vperm.xlu0 %404, %v400
        %v406 = vpop.permute.xlu0 %405
        %407 = vset.pattern.permute.xlu0 0
        %408 = vperm.xlu0 %407, %v401
        %v409 = vpop.permute.xlu0 %408
        %410 = vset.pattern.permute.xlu0 0
        %411 = vperm.xlu0 %410, %v402
        %v412 = vpop.permute.xlu0 %411
        %413 = vset.pattern.permute.xlu0 0
        %414 = vperm.xlu0 %413, %v403
        %v415 = vpop.permute.xlu0 %414
        %vm416 = vcmp.eq.s32.totalorder %v406, 1
        %vm417 = vcmp.eq.s32.totalorder %v409, 1
        %vm418 = vcmp.eq.s32.totalorder %v412, 1
        %vm419 = vcmp.eq.s32.totalorder %v415, 1
        %v420 = vsel %vm416, %v388, %v396
        %v421 = vsel %vm417, %v389, %v397
        %v422 = vsel %vm418, %v390, %v398
        %v423 = vsel %vm419, %v391, %v399
        %424 = vst [vmem:[%s233] sm:$0xff] %v420
        %425 = vst [vmem:[%s233 + $0x8] sm:$0xff] %v421
        %426 = vst [vmem:[%s233 + $0x10] sm:$0xff] %v422
        %427 = vst [vmem:[%s233 + $0x18] sm:$0xff] %v423
      $region40: #{gnn_adapt_forward.1} parent=35 // pred_fallthru
        _
      %p428 = scmp.le.s32.totalorder %s236, 1
      %p429 = scmp.ge.s32.totalorder %s237, 1
      %p430 = pnand %p428, %p429
      %p431 = pneg %p430
      // Predicated region
      $region41: #{gnn_adapt_forward.1} parent=35 // pred_check
        _
      $region42: #{gnn_adapt_forward.1} parent=35 // pred_check_branch
        %433 = sbr.rel (%p430) target = $region44
      $region43: #{gnn_adapt_forward.1} parent=35 // pred_region
        %s434 = scalar_lea.vmem %s4, 64
        %v435 = vld [vmem:[%s434] sm:$0xf]
        %v436 = vld [vmem:[%s434 + $0x4] sm:$0xf]
        %v437 = vld [vmem:[%s434 + $0x8] sm:$0xf]
        %v438 = vld [vmem:[%s434 + $0xc] sm:$0xf]
        %v439 = vld [vmem:[%s434 + $0x10] sm:$0xf]
        %v440 = vld [vmem:[%s434 + $0x14] sm:$0xf]
        %v441 = vld [vmem:[%s434 + $0x18] sm:$0xf]
        %v442 = vld [vmem:[%s434 + $0x1c] sm:$0xf]
        %v443 = vld [vmem:[%s434 + $0x20] sm:$0xf]
        %v444 = vld [vmem:[%s434 + $0x24] sm:$0xf]
        %v445 = vld [vmem:[%s434 + $0x28] sm:$0xf]
        %v446 = vld [vmem:[%s434 + $0x2c] sm:$0xf]
        %v447 = vld [vmem:[%s434 + $0x30] sm:$0xf]
        %v448 = vld [vmem:[%s434 + $0x34] sm:$0xf]
        %v449 = vld [vmem:[%s434 + $0x38] sm:$0xf]
        %v450 = vld [vmem:[%s434 + $0x3c] sm:$0xf]
        %s451 = scalar_lea.vmem %s5, 1
        %v452 = vld [vmem:[%s451] sm:$0x1]
        %v454 = vlaneseq
        %v455 = vshrl.u32 %v454, 7
        %v456 = vsub.s32 0, %v455
        %v457 = vrot.slane %v452, %v456
        %v463 = vunpack.c.l.b16 %v242
        %v464 = vunpack.c.l.b16 %v243
        %v465 = vunpack.c.l.b16 %v244
        %v466 = vunpack.c.l.b16 %v245
        %v467 = vpack.c.b16 %v464, %v463
        %v468 = vpack.c.b16 %v466, %v465
        %v487 = vunpack.c.l.b16 %v435
        %v488 = vunpack.c.l.b16 %v436
        %v489 = vunpack.c.l.b16 %v437
        %v490 = vunpack.c.l.b16 %v438
        %v491 = vunpack.c.l.b16 %v439
        %v492 = vunpack.c.l.b16 %v440
        %v493 = vunpack.c.l.b16 %v441
        %v494 = vunpack.c.l.b16 %v442
        %v495 = vunpack.c.l.b16 %v443
        %v496 = vunpack.c.l.b16 %v444
        %v497 = vunpack.c.l.b16 %v445
        %v498 = vunpack.c.l.b16 %v446
        %v499 = vunpack.c.l.b16 %v447
        %v500 = vunpack.c.l.b16 %v448
        %v501 = vunpack.c.l.b16 %v449
        %v502 = vunpack.c.l.b16 %v450
        %v503 = vpack.c.b16 %v488, %v487
        %v504 = vpack.c.b16 %v490, %v489
        %v505 = vpack.c.b16 %v492, %v491
        %v506 = vpack.c.b16 %v494, %v493
        %v507 = vpack.c.b16 %v496, %v495
        %v508 = vpack.c.b16 %v498, %v497
        %v509 = vpack.c.b16 %v500, %v499
        %v510 = vpack.c.b16 %v502, %v501
        %519 = vmatprep.subr.bf16.mxu0 0
        %520 = vmatpush1.bf16.msra.mxu0 %v510
        %521 = vmatprep.subr.bf16.mxu0 0
        %522 = vmatpush1.bf16.msra.mxu0 %v509
        %523 = vmatprep.subr.bf16.mxu0 0
        %524 = vmatpush1.bf16.msra.mxu0 %v508
        %525 = vmatprep.subr.bf16.mxu0 0
        %526 = vmatpush1.bf16.msra.mxu0 %v507
        %527 = vmatprep.subr.bf16.mxu0 0
        %528 = vmatpush1.bf16.msra.mxu0 %v506
        %529 = vmatprep.subr.bf16.mxu0 0
        %530 = vmatpush1.bf16.msra.mxu0 %v505
        %531 = vmatprep.subr.bf16.mxu0 0
        %532 = vmatpush1.bf16.msra.mxu0 %v504
        %533 = vmatprep.subr.bf16.mxu0 0
        %534 = vmatpush1.bf16.msra.mxu0 %v503
        %535 = vmatprep.subr.bf16.mxu0 0
        %536 = vmatpush2.bf16.msra.mxu0 0
        %537 = vmatprep.subr.bf16.mxu0 0
        %538 = vmatpush2.bf16.msra.mxu0 0
        %539 = vmatprep.subr.bf16.mxu0 0
        %540 = vmatpush2.bf16.msra.mxu0 0
        %541 = vmatprep.subr.bf16.mxu0 0
        %542 = vmatpush2.bf16.msra.mxu0 0
        %543 = vmatprep.subr.bf16.mxu0 0
        %544 = vmatpush2.bf16.msra.mxu0 0
        %545 = vmatprep.subr.bf16.mxu0 0
        %546 = vmatpush2.bf16.msra.mxu0 0
        %547 = vmatprep.subr.bf16.mxu0 0
        %548 = vmatpush2.bf16.msra.mxu0 0
        %549 = vmatprep.subr.bf16.mxu0 0
        %550 = vmatpush2.bf16.msra.mxu0 0
        %551 = vmatprep.mubr.bf16.mxu0 0
        %552 = vmatmul.mubr.bf16.gmra.mxu0 %v467
        %v553 = vpop.f32.mrf.mxu0
        %v554 = vadd.f32 %v457, %v553
        %v555 = vpop.f32.mrf.mxu0
        %v556 = vpop.f32.mrf.mxu0
        %v557 = vadd.f32 %v457, %v556
        %v558 = vpop.f32.mrf.mxu0
        %559 = vmatprep.mubr.bf16.mxu0 0
        %560 = vmatmul.mubr.bf16.gmra.mxu0 %v468
        %v561 = vpop.f32.mrf.mxu0
        %v562 = vadd.f32 %v457, %v561
        %v563 = vpop.f32.mrf.mxu0
        %v564 = vpop.f32.mrf.mxu0
        %v565 = vadd.f32 %v457, %v564
        %v566 = vpop.f32.mrf.mxu0
        %567 = vdwg.mxu0
        %v568 = vtanh.pop %v554
        %v569 = vtanh.pop %v557
        %v570 = vtanh.pop %v562
        %v571 = vtanh.pop %v565
        %vm572 = vcmp.eq.s32.totalorder %v238, 1
        %vm573 = vcmp.eq.s32.totalorder %v239, 1
        %vm574 = vcmp.eq.s32.totalorder %v240, 1
        %vm575 = vcmp.eq.s32.totalorder %v241, 1
        %v576 = vld [vmem:[%s233] sm:$0xff]
        %v577 = vld [vmem:[%s233 + $0x8] sm:$0xff]
        %v578 = vld [vmem:[%s233 + $0x10] sm:$0xff]
        %v579 = vld [vmem:[%s233 + $0x18] sm:$0xff]
        %v580 = vsel %vm572, 1, 0
        %v581 = vsel %vm573, 1, 0
        %v582 = vsel %vm574, 1, 0
        %v583 = vsel %vm575, 1, 0
        %584 = vset.pattern.permute.xlu0 0
        %585 = vperm.xlu0 %584, %v580
        %v586 = vpop.permute.xlu0 %585
        %587 = vset.pattern.permute.xlu0 0
        %588 = vperm.xlu0 %587, %v581
        %v589 = vpop.permute.xlu0 %588
        %590 = vset.pattern.permute.xlu0 0
        %591 = vperm.xlu0 %590, %v582
        %v592 = vpop.permute.xlu0 %591
        %593 = vset.pattern.permute.xlu0 0
        %594 = vperm.xlu0 %593, %v583
        %v595 = vpop.permute.xlu0 %594
        %vm596 = vcmp.eq.s32.totalorder %v586, 1
        %vm597 = vcmp.eq.s32.totalorder %v589, 1
        %vm598 = vcmp.eq.s32.totalorder %v592, 1
        %vm599 = vcmp.eq.s32.totalorder %v595, 1
        %v600 = vsel %vm596, %v568, %v576
        %v601 = vsel %vm597, %v569, %v577
        %v602 = vsel %vm598, %v570, %v578
        %v603 = vsel %vm599, %v571, %v579
        %604 = vst [vmem:[%s233] sm:$0xff] %v600
        %605 = vst [vmem:[%s233 + $0x8] sm:$0xff] %v601
        %606 = vst [vmem:[%s233 + $0x10] sm:$0xff] %v602
        %607 = vst [vmem:[%s233 + $0x18] sm:$0xff] %v603
      $region44: #{gnn_adapt_forward.1} parent=35 // pred_fallthru
        _
      %p608 = scmp.le.s32.totalorder %s236, 2
      %p609 = scmp.ge.s32.totalorder %s237, 2
      %p610 = pnand %p608, %p609
      %p611 = pneg %p610
      // Predicated region
      $region45: #{gnn_adapt_forward.1} parent=35 // pred_check
        _
      $region46: #{gnn_adapt_forward.1} parent=35 // pred_check_branch
        %613 = sbr.rel (%p610) target = $region48
      $region47: #{gnn_adapt_forward.1} parent=35 // pred_region
        %s614 = scalar_lea.vmem %s4, 128
        %v615 = vld [vmem:[%s614] sm:$0xf]
        %v616 = vld [vmem:[%s614 + $0x4] sm:$0xf]
        %v617 = vld [vmem:[%s614 + $0x8] sm:$0xf]
        %v618 = vld [vmem:[%s614 + $0xc] sm:$0xf]
        %v619 = vld [vmem:[%s614 + $0x10] sm:$0xf]
        %v620 = vld [vmem:[%s614 + $0x14] sm:$0xf]
        %v621 = vld [vmem:[%s614 + $0x18] sm:$0xf]
        %v622 = vld [vmem:[%s614 + $0x1c] sm:$0xf]
        %v623 = vld [vmem:[%s614 + $0x20] sm:$0xf]
        %v624 = vld [vmem:[%s614 + $0x24] sm:$0xf]
        %v625 = vld [vmem:[%s614 + $0x28] sm:$0xf]
        %v626 = vld [vmem:[%s614 + $0x2c] sm:$0xf]
        %v627 = vld [vmem:[%s614 + $0x30] sm:$0xf]
        %v628 = vld [vmem:[%s614 + $0x34] sm:$0xf]
        %v629 = vld [vmem:[%s614 + $0x38] sm:$0xf]
        %v630 = vld [vmem:[%s614 + $0x3c] sm:$0xf]
        %s631 = scalar_lea.vmem %s5, 2
        %v632 = vld [vmem:[%s631] sm:$0x1]
        %v634 = vlaneseq
        %v635 = vshrl.u32 %v634, 7
        %v636 = vsub.s32 0, %v635
        %v637 = vrot.slane %v632, %v636
        %v643 = vunpack.c.l.b16 %v242
        %v644 = vunpack.c.l.b16 %v243
        %v645 = vunpack.c.l.b16 %v244
        %v646 = vunpack.c.l.b16 %v245
        %v647 = vpack.c.b16 %v644, %v643
        %v648 = vpack.c.b16 %v646, %v645
        %v667 = vunpack.c.l.b16 %v615
        %v668 = vunpack.c.l.b16 %v616
        %v669 = vunpack.c.l.b16 %v617
        %v670 = vunpack.c.l.b16 %v618
        %v671 = vunpack.c.l.b16 %v619
        %v672 = vunpack.c.l.b16 %v620
        %v673 = vunpack.c.l.b16 %v621
        %v674 = vunpack.c.l.b16 %v622
        %v675 = vunpack.c.l.b16 %v623
        %v676 = vunpack.c.l.b16 %v624
        %v677 = vunpack.c.l.b16 %v625
        %v678 = vunpack.c.l.b16 %v626
        %v679 = vunpack.c.l.b16 %v627
        %v680 = vunpack.c.l.b16 %v628
        %v681 = vunpack.c.l.b16 %v629
        %v682 = vunpack.c.l.b16 %v630
        %v683 = vpack.c.b16 %v668, %v667
        %v684 = vpack.c.b16 %v670, %v669
        %v685 = vpack.c.b16 %v672, %v671
        %v686 = vpack.c.b16 %v674, %v673
        %v687 = vpack.c.b16 %v676, %v675
        %v688 = vpack.c.b16 %v678, %v677
        %v689 = vpack.c.b16 %v680, %v679
        %v690 = vpack.c.b16 %v682, %v681
        %699 = vmatprep.subr.bf16.mxu0 0
        %700 = vmatpush1.bf16.msra.mxu0 %v690
        %701 = vmatprep.subr.bf16.mxu0 0
        %702 = vmatpush1.bf16.msra.mxu0 %v689
        %703 = vmatprep.subr.bf16.mxu0 0
        %704 = vmatpush1.bf16.msra.mxu0 %v688
        %705 = vmatprep.subr.bf16.mxu0 0
        %706 = vmatpush1.bf16.msra.mxu0 %v687
        %707 = vmatprep.subr.bf16.mxu0 0
        %708 = vmatpush1.bf16.msra.mxu0 %v686
        %709 = vmatprep.subr.bf16.mxu0 0
        %710 = vmatpush1.bf16.msra.mxu0 %v685
        %711 = vmatprep.subr.bf16.mxu0 0
        %712 = vmatpush1.bf16.msra.mxu0 %v684
        %713 = vmatprep.subr.bf16.mxu0 0
        %714 = vmatpush1.bf16.msra.mxu0 %v683
        %715 = vmatprep.subr.bf16.mxu0 0
        %716 = vmatpush2.bf16.msra.mxu0 0
        %717 = vmatprep.subr.bf16.mxu0 0
        %718 = vmatpush2.bf16.msra.mxu0 0
        %719 = vmatprep.subr.bf16.mxu0 0
        %720 = vmatpush2.bf16.msra.mxu0 0
        %721 = vmatprep.subr.bf16.mxu0 0
        %722 = vmatpush2.bf16.msra.mxu0 0
        %723 = vmatprep.subr.bf16.mxu0 0
        %724 = vmatpush2.bf16.msra.mxu0 0
        %725 = vmatprep.subr.bf16.mxu0 0
        %726 = vmatpush2.bf16.msra.mxu0 0
        %727 = vmatprep.subr.bf16.mxu0 0
        %728 = vmatpush2.bf16.msra.mxu0 0
        %729 = vmatprep.subr.bf16.mxu0 0
        %730 = vmatpush2.bf16.msra.mxu0 0
        %731 = vmatprep.mubr.bf16.mxu0 0
        %732 = vmatmul.mubr.bf16.gmra.mxu0 %v647
        %v733 = vpop.f32.mrf.mxu0
        %v734 = vadd.f32 %v637, %v733
        %v735 = vpop.f32.mrf.mxu0
        %v736 = vpop.f32.mrf.mxu0
        %v737 = vadd.f32 %v637, %v736
        %v738 = vpop.f32.mrf.mxu0
        %739 = vmatprep.mubr.bf16.mxu0 0
        %740 = vmatmul.mubr.bf16.gmra.mxu0 %v648
        %v741 = vpop.f32.mrf.mxu0
        %v742 = vadd.f32 %v637, %v741
        %v743 = vpop.f32.mrf.mxu0
        %v744 = vpop.f32.mrf.mxu0
        %v745 = vadd.f32 %v637, %v744
        %v746 = vpop.f32.mrf.mxu0
        %747 = vdwg.mxu0
        %v748 = vtanh.pop %v734
        %v749 = vtanh.pop %v737
        %v750 = vtanh.pop %v742
        %v751 = vtanh.pop %v745
        %vm752 = vcmp.eq.s32.totalorder %v238, 2
        %vm753 = vcmp.eq.s32.totalorder %v239, 2
        %vm754 = vcmp.eq.s32.totalorder %v240, 2
        %vm755 = vcmp.eq.s32.totalorder %v241, 2
        %v756 = vld [vmem:[%s233] sm:$0xff]
        %v757 = vld [vmem:[%s233 + $0x8] sm:$0xff]
        %v758 = vld [vmem:[%s233 + $0x10] sm:$0xff]
        %v759 = vld [vmem:[%s233 + $0x18] sm:$0xff]
        %v760 = vsel %vm752, 1, 0
        %v761 = vsel %vm753, 1, 0
        %v762 = vsel %vm754, 1, 0
        %v763 = vsel %vm755, 1, 0
        %764 = vset.pattern.permute.xlu0 0
        %765 = vperm.xlu0 %764, %v760
        %v766 = vpop.permute.xlu0 %765
        %767 = vset.pattern.permute.xlu0 0
        %768 = vperm.xlu0 %767, %v761
        %v769 = vpop.permute.xlu0 %768
        %770 = vset.pattern.permute.xlu0 0
        %771 = vperm.xlu0 %770, %v762
        %v772 = vpop.permute.xlu0 %771
        %773 = vset.pattern.permute.xlu0 0
        %774 = vperm.xlu0 %773, %v763
        %v775 = vpop.permute.xlu0 %774
        %vm776 = vcmp.eq.s32.totalorder %v766, 1
        %vm777 = vcmp.eq.s32.totalorder %v769, 1
        %vm778 = vcmp.eq.s32.totalorder %v772, 1
        %vm779 = vcmp.eq.s32.totalorder %v775, 1
        %v780 = vsel %vm776, %v748, %v756
        %v781 = vsel %vm777, %v749, %v757
        %v782 = vsel %vm778, %v750, %v758
        %v783 = vsel %vm779, %v751, %v759
        %784 = vst [vmem:[%s233] sm:$0xff] %v780
        %785 = vst [vmem:[%s233 + $0x8] sm:$0xff] %v781
        %786 = vst [vmem:[%s233 + $0x10] sm:$0xff] %v782
        %787 = vst [vmem:[%s233 + $0x18] sm:$0xff] %v783
      $region48: #{gnn_adapt_forward.1} parent=35 // pred_fallthru
        _
      %s788 = smul.u32 4, %s27
      %p789 = scmp.lt.s32.totalorder %s788, 7
      %s790 = scalar_select %p789, %s788, 7
      %s791 = smul.addr %s790, 8
      %s792 = scalar_lea.vmem %s6, %s791
      // Predicated region
      $region49: #{gnn_adapt_forward.1} parent=35 // pred_check
        %p793 = pneg %p139
      $region50: #{gnn_adapt_forward.1} parent=35 // pred_check_branch
        %795 = sbr.rel (%p793) target = $region52
      $region51: #{gnn_adapt_forward.1} parent=35 // pred_region
        %s796 = smul.u32 4, %s27
      $region52: #{gnn_adapt_forward.1} parent=35 // pred_fallthru
        _
    $region36: #{gnn_adapt_forward.1} parent=5 // pred_fallthru
      _
    %p797 = scmp.le.s32.totalorder 2, %s22
    // Predicated region
    $region53: #{gnn_adapt_forward.1} parent=5 // pred_check
      %p798 = pneg %p797
    $region54: #{gnn_adapt_forward.1} parent=5 // pred_check_branch
      %800 = sbr.rel (%p798) target = $region56
    $region55: #{gnn_adapt_forward.1} parent=5 // pred_region
      %s801 = ssub.s32 %s22, 2
      // Predicated region
      $region57: #{gnn_adapt_forward.1} parent=55 // pred_check
        %p802 = pneg %p145
      $region58: #{gnn_adapt_forward.1} parent=55 // pred_check_branch
        %804 = sbr.rel (%p802) target = $region60
      $region59: #{gnn_adapt_forward.1} parent=55 // pred_region
        %s805 = smul.u32 4, %s28
        %p806 = scmp.lt.s32.totalorder %s805, 7
        %s807 = scalar_select %p806, %s805, 7
        %s808 = smul.addr %s807, 8
        %s809 = scalar_lea.vmem %s6, %s808
      $region60: #{gnn_adapt_forward.1} parent=55 // pred_fallthru
        _
    $region56: #{gnn_adapt_forward.1} parent=5 // pred_fallthru
      _
  $region6: #{gnn_adapt_forward.1} parent=0 // loop_footer
    %s26 = sadd.s32 1, %s22
  $region7: #{gnn_adapt_forward.1} parent=0 // loop_footer_branch
    %21 = sbr.rel target = $region3
  $region8: #{gnn_adapt_forward.1} parent=0 // loop_exit
    _

</llo_original>
